<compile_context>
chip_gen: v7x
topology: tpu7x:2x2x1
jax: 0.10.0
libtpu: 0.0.40
codegen_flags: <defaults>
</compile_context>

<pallas_src>
import functools
import math

import jax
import jax.numpy as jnp
from jax.experimental import pallas as pl
from jax.experimental.pallas import tpu as pltpu


# ---------------------------------------------------------------- in-kernel ops
def _gelu_exact(x):
    # PyTorch nn.GELU() / F.gelu default (approximate='none'): 0.5*x*(1+erf(x/sqrt(2)))
    return 0.5 * x * (1.0 + jax.lax.erf(x * (1.0 / math.sqrt(2.0))))


def _conv3_cl(x, w_ref):
    """1-D conv, kernel=3, padding=1, no bias, in (C, L) layout.

    x:     (Cin, L) f32
    w_ref: (3, Cout, Cin) ref; tap k multiplies x[:, l + k - 1]
    returns (Cout, L) f32
    """
    Cin, L = x.shape
    lane = jax.lax.broadcasted_iota(jnp.int32, (Cin, L), 1)
    # x[:, l-1] / x[:, l+1] via circular roll (XLU) + cheap boundary mask (VPU).
    x_m = jnp.where(lane == 0, 0.0, pltpu.roll(x, shift=1, axis=1))
    x_p = jnp.where(lane == L - 1, 0.0, pltpu.roll(x, shift=L - 1, axis=1))
    w = w_ref[...].astype(jnp.float32)
    # Channel counts are tiny here, so three small MXU pushes are fine; fusing to a
    # single K=3*Cin matmul would require a materializing sublane concat of x.
    y = jnp.dot(w[0], x_m, preferred_element_type=jnp.float32)
    y += jnp.dot(w[1], x, preferred_element_type=jnp.float32)
    y += jnp.dot(w[2], x_p, preferred_element_type=jnp.float32)
    return y


def _groupnorm1(h, gamma, beta, eps=1e-5):
    """GroupNorm(num_groups=1): normalize over all (C, L) of the sample, then
    per-channel affine. gamma/beta: (C, 1), broadcast along lanes (L).
    One-pass stats: var = E[x^2] - E[x]^2."""
    n = h.shape[0] * h.shape[1]
    s = jnp.sum(h)
    ss = jnp.sum(h * h)
    mean = s * (1.0 / n)
    var = ss * (1.0 / n) - mean * mean
    inv = jax.lax.rsqrt(var + eps)
    return (h - mean) * inv * gamma + beta


def _double_conv_kernel(x_ref, w1_ref, g1_ref, b1_ref, w2_ref, g2_ref, b2_ref,
                        o_ref, *, residual):
    x = x_ref[...].astype(jnp.float32)                 # (Cin, L)
    h = _conv3_cl(x, w1_ref)                           # (Cmid, L) f32
    h = _groupnorm1(h, g1_ref[...].astype(jnp.float32), b1_ref[...].astype(jnp.float32))
    h = _gelu_exact(h)
    h = _conv3_cl(h, w2_ref)                           # (Cout, L) f32
    h = _groupnorm1(h, g2_ref[...].astype(jnp.float32), b2_ref[...].astype(jnp.float32))
    if residual:
        h = _gelu_exact(x + h)                         # requires Cin == Cout
    o_ref[...] = h.astype(o_ref.dtype)


# ---------------------------------------------------------------- host wrapper
def double_conv(x_ncl, w1, g1, b1, w2, g2, b2, *, residual=False):
    """x_ncl: (B, Cin, L); w1: (Cmid, Cin, 3); w2: (Cout, Cmid, 3); g/b: (C,).

    Returns (B, Cout, L) in the input's dtype. Pass bf16 inputs/weights to halve
    DMA bytes; accumulation is always f32 inside the kernel.
    """
    B, Cin, L = x_ncl.shape
    Cmid = w1.shape[0]
    Cout = w2.shape[0]
    if residual:
        assert Cin == Cout, "residual path requires in_channels == out_channels"

    # Weights -> per-tap (3, Cout, Cin) matmul form; affine params -> (C, 1) columns.
    w1_t = jnp.transpose(w1, (2, 0, 1))                # (3, Cmid, Cin)
    w2_t = jnp.transpose(w2, (2, 0, 1))                # (3, Cout, Cmid)
    g1r, b1r = g1.reshape(Cmid, 1), b1.reshape(Cmid, 1)
    g2r, b2r = g2.reshape(Cout, 1), b2.reshape(Cout, 1)

    # Sample-resident design: one (C, L) sample plus intermediates live in VMEM per
    # grid step. Estimate the footprint and fail loudly instead of silently spilling.
    cmax = max(Cin, Cmid, Cout)
    est_bytes = 4 * L * (3 * Cin + 3 * Cmid + 2 * Cout + 2 * (Cin + Cout)) + 4 * L * cmax
    assert est_bytes < 48 * 1024 * 1024, (
        "sample too large for sample-resident DoubleConv kernel; needs L-tiling "
        "with carried GroupNorm statistics")
    vmem_limit = int(min(96 * 1024 * 1024, max(32 * 1024 * 1024, 2 * est_bytes)))

    kernel = functools.partial(_double_conv_kernel, residual=residual)

    out = pl.pallas_call(
        kernel,
        out_shape=jax.ShapeDtypeStruct((B, Cout, L), x_ncl.dtype),
        grid=(B,),
        in_specs=[
            pl.BlockSpec((pl.Squeezed(), Cin, L), lambda b: (b, 0, 0)),
            pl.BlockSpec((3, Cmid, Cin), lambda b: (0, 0, 0)),
            pl.BlockSpec((Cmid, 1), lambda b: (0, 0)),
            pl.BlockSpec((Cmid, 1), lambda b: (0, 0)),
            pl.BlockSpec((3, Cout, Cmid), lambda b: (0, 0, 0)),
            pl.BlockSpec((Cout, 1), lambda b: (0, 0)),
            pl.BlockSpec((Cout, 1), lambda b: (0, 0)),
        ],
        out_specs=pl.BlockSpec((pl.Squeezed(), Cout, L), lambda b: (b, 0, 0)),
        compiler_params=pltpu.CompilerParams(
            dimension_semantics=("parallel",),
            vmem_limit_bytes=vmem_limit,
        ),
    )(x_ncl, w1_t, g1r, b1r, w2_t, g2r, b2r)

    return out  # already (B, Cout, L) — no host transpose needed


# ---------------------------------------------------------------- pure-JAX ref
def _ref_double_conv(x, w1, g1, b1, w2, g2, b2, *, residual=False, eps=1e-5):
    def conv(h, w):
        return jax.lax.conv_general_dilated(
            h, w, window_strides=(1,), padding=((1, 1),),
            dimension_numbers=("NCH", "OIH", "NCH"))

    def gn(h, g, b):
        m = jnp.mean(h, axis=(1, 2), keepdims=True)
        v = jnp.mean((h - m) ** 2, axis=(1, 2), keepdims=True)
        return (h - m) * jax.lax.rsqrt(v + eps) * g[None, :, None] + b[None, :, None]

    def gelu(h):
        return 0.5 * h * (1.0 + jax.lax.erf(h / math.sqrt(2.0)))

    h = gn(conv(x, w1), g1, b1)
    h = gelu(h)
    h = gn(conv(h, w2), g2, b2)
    return gelu(x + h) if residual else h


# ---------------------------------------------------------------------- main
if __name__ == "__main__":
    key = jax.random.PRNGKey(0)
    B, L = 2, 128

    # ---- case 1: non-residual, Cin=4 -> Cmid=8 -> Cout=8 ----
    Cin, Cmid, Cout = 4, 8, 8
    ks = jax.random.split(key, 7)
    x = jax.random.normal(ks[0], (B, Cin, L), jnp.float32)
    w1 = jax.random.normal(ks[1], (Cmid, Cin, 3), jnp.float32) * 0.2
    w2 = jax.random.normal(ks[2], (Cout, Cmid, 3), jnp.float32) * 0.2
    g1 = 1.0 + 0.1 * jax.random.normal(ks[3], (Cmid,), jnp.float32)
    b1 = 0.1 * jax.random.normal(ks[4], (Cmid,), jnp.float32)
    g2 = 1.0 + 0.1 * jax.random.normal(ks[5], (Cout,), jnp.float32)
    b2 = 0.1 * jax.random.normal(ks[6], (Cout,), jnp.float32)

    out = jax.block_until_ready(double_conv(x, w1, g1, b1, w2, g2, b2, residual=False))
    ref = _ref_double_conv(x, w1, g1, b1, w2, g2, b2, residual=False)
    assert out.shape == (B, Cout, L)
    assert jnp.allclose(out, ref, atol=2e-4, rtol=2e-4), "mismatch (non-residual)"

    # ---- case 2: residual, Cin = Cmid = Cout = 8 ----
    Cin2 = Cmid2 = Cout2 = 8
    ks2 = jax.random.split(jax.random.PRNGKey(1), 7)
    x2 = jax.random.normal(ks2[0], (B, Cin2, L), jnp.float32)
    w1b = jax.random.normal(ks2[1], (Cmid2, Cin2, 3), jnp.float32) * 0.2
    w2b = jax.random.normal(ks2[2], (Cout2, Cmid2, 3), jnp.float32) * 0.2
    g1b = 1.0 + 0.1 * jax.random.normal(ks2[3], (Cmid2,), jnp.float32)
    b1b = 0.1 * jax.random.normal(ks2[4], (Cmid2,), jnp.float32)
    g2b = 1.0 + 0.1 * jax.random.normal(ks2[5], (Cout2,), jnp.float32)
    b2b = 0.1 * jax.random.normal(ks2[6], (Cout2,), jnp.float32)

    out2 = jax.block_until_ready(
        double_conv(x2, w1b, g1b, b1b, w2b, g2b, b2b, residual=True))
    ref2 = _ref_double_conv(x2, w1b, g1b, b1b, w2b, g2b, b2b, residual=True)
    assert out2.shape == (B, Cout2, L)
    assert jnp.allclose(out2, ref2, atol=2e-4, rtol=2e-4), "mismatch (residual)"

    print("KERNEL_OK")
</pallas_src>

<mosaic_0001>
module attributes {stable_mosaic.version = 11 : i64} {
  func.func @_double_conv_kernel(%arg0: i32, %arg1: memref<1x4x128xf32, #tpu.memory_space<vmem>>, %arg2: memref<3x8x4xf32, #tpu.memory_space<vmem>>, %arg3: memref<8x1xf32, #tpu.memory_space<vmem>>, %arg4: memref<8x1xf32, #tpu.memory_space<vmem>>, %arg5: memref<3x8x8xf32, #tpu.memory_space<vmem>>, %arg6: memref<8x1xf32, #tpu.memory_space<vmem>>, %arg7: memref<8x1xf32, #tpu.memory_space<vmem>>, %arg8: memref<1x8x128xf32, #tpu.memory_space<vmem>>) attributes {dimension_semantics = [#tpu.dimension_semantics<parallel>], iteration_bounds = array<i64: 2>, scalar_prefetch = 0 : i64, scratch_operands = 0 : i64, tpu.core_type = #tpu.core_type<tc>, window_params = [{transform_indices = @transform_0, window_bounds = array<i64: 1, 4, 128>}, {pipeline_mode = #tpu.pipeline_mode<synchronous>, transform_indices = @transform_1, window_bounds = array<i64: 3, 8, 4>}, {pipeline_mode = #tpu.pipeline_mode<synchronous>, transform_indices = @transform_2, window_bounds = array<i64: 8, 1>}, {pipeline_mode = #tpu.pipeline_mode<synchronous>, transform_indices = @transform_3, window_bounds = array<i64: 8, 1>}, {pipeline_mode = #tpu.pipeline_mode<synchronous>, transform_indices = @transform_4, window_bounds = array<i64: 3, 8, 8>}, {pipeline_mode = #tpu.pipeline_mode<synchronous>, transform_indices = @transform_5, window_bounds = array<i64: 8, 1>}, {pipeline_mode = #tpu.pipeline_mode<synchronous>, transform_indices = @transform_6, window_bounds = array<i64: 8, 1>}, {transform_indices = @transform_7, window_bounds = array<i64: 1, 8, 128>}]} {
    %c0 = arith.constant 0 : index
    %c0_0 = arith.constant 0 : index
    %c0_1 = arith.constant 0 : index
    %0 = vector.load %arg1[%c0, %c0_0, %c0_1] : memref<1x4x128xf32, #tpu.memory_space<vmem>>, vector<1x4x128xf32>
    %1 = vector.shape_cast %0 : vector<1x4x128xf32> to vector<4x128xf32>
    %2 = tpu.iota {dimensions = array<i32: 1>} : vector<4x128xi32>
    %c0_i32 = arith.constant 0 : i32
    %3 = vector.broadcast %c0_i32 : i32 to vector<4x128xi32>
    %4 = arith.cmpi eq, %2, %3 : vector<4x128xi32>
    %c1_i32 = arith.constant 1 : i32
    %5 = tpu.dynamic_rotate %1 by %c1_i32 dim 1 : vector<4x128xf32>, i32 -> vector<4x128xf32>
    %cst = arith.constant 0.000000e+00 : f32
    %6 = vector.broadcast %cst : f32 to vector<4x128xf32>
    %7 = arith.select %4, %6, %5 : vector<4x128xi1>, vector<4x128xf32>
    %c127_i32 = arith.constant 127 : i32
    %8 = vector.broadcast %c127_i32 : i32 to vector<4x128xi32>
    %9 = arith.cmpi eq, %2, %8 : vector<4x128xi32>
    %c127_i32_2 = arith.constant 127 : i32
    %10 = tpu.dynamic_rotate %1 by %c127_i32_2 dim 1 : vector<4x128xf32>, i32 -> vector<4x128xf32>
    %cst_3 = arith.constant 0.000000e+00 : f32
    %11 = vector.broadcast %cst_3 : f32 to vector<4x128xf32>
    %12 = arith.select %9, %11, %10 : vector<4x128xi1>, vector<4x128xf32>
    %c0_4 = arith.constant 0 : index
    %c0_5 = arith.constant 0 : index
    %c0_6 = arith.constant 0 : index
    %13 = vector.load %arg2[%c0_4, %c0_5, %c0_6] : memref<3x8x4xf32, #tpu.memory_space<vmem>>, vector<3x8x4xf32>
    %14 = vector.extract_strided_slice %13 {offsets = [0, 0, 0], sizes = [1, 8, 4], strides = [1, 1, 1]} : vector<3x8x4xf32> to vector<1x8x4xf32>
    %15 = vector.shape_cast %14 : vector<1x8x4xf32> to vector<8x4xf32>
    %cst_7 = arith.constant dense<0.000000e+00> : vector<8x128xf32>
    %16 = tpu.matmul %15, %7, %cst_7 {dimension_numbers = #tpu.dot_dimension_numbers<[1], [0], [0], [1], [0, 0, 1, 1], [], []>} : vector<8x4xf32>, vector<4x128xf32>, vector<8x128xf32> -> vector<8x128xf32>
    %17 = vector.extract_strided_slice %13 {offsets = [1, 0, 0], sizes = [1, 8, 4], strides = [1, 1, 1]} : vector<3x8x4xf32> to vector<1x8x4xf32>
    %18 = vector.shape_cast %17 : vector<1x8x4xf32> to vector<8x4xf32>
    %cst_8 = arith.constant dense<0.000000e+00> : vector<8x128xf32>
    %19 = tpu.matmul %18, %1, %cst_8 {dimension_numbers = #tpu.dot_dimension_numbers<[1], [0], [0], [1], [0, 0, 1, 1], [], []>} : vector<8x4xf32>, vector<4x128xf32>, vector<8x128xf32> -> vector<8x128xf32>
    %20 = arith.addf %16, %19 : vector<8x128xf32>
    %21 = vector.extract_strided_slice %13 {offsets = [2, 0, 0], sizes = [1, 8, 4], strides = [1, 1, 1]} : vector<3x8x4xf32> to vector<1x8x4xf32>
    %22 = vector.shape_cast %21 : vector<1x8x4xf32> to vector<8x4xf32>
    %cst_9 = arith.constant dense<0.000000e+00> : vector<8x128xf32>
    %23 = tpu.matmul %22, %12, %cst_9 {dimension_numbers = #tpu.dot_dimension_numbers<[1], [0], [0], [1], [0, 0, 1, 1], [], []>} : vector<8x4xf32>, vector<4x128xf32>, vector<8x128xf32> -> vector<8x128xf32>
    %24 = arith.addf %20, %23 : vector<8x128xf32>
    %c0_10 = arith.constant 0 : index
    %c0_11 = arith.constant 0 : index
    %25 = vector.load %arg3[%c0_10, %c0_11] : memref<8x1xf32, #tpu.memory_space<vmem>>, vector<8x1xf32>
    %c0_12 = arith.constant 0 : index
    %c0_13 = arith.constant 0 : index
    %26 = vector.load %arg4[%c0_12, %c0_13] : memref<8x1xf32, #tpu.memory_space<vmem>>, vector<8x1xf32>
    %27 = vector.shape_cast %24 : vector<8x128xf32> to vector<1x8x128xf32>
    %cst_14 = arith.constant dense<0.000000e+00> : vector<1xf32>
    %28 = vector.multi_reduction <add>, %27, %cst_14 [1, 2] : vector<1x8x128xf32> to vector<1xf32>
    %29 = vector.shape_cast %28 : vector<1xf32> to vector<1x1x1xf32>
    %30 = vector.extract %29[0, 0, 0] : f32 from vector<1x1x1xf32>
    %31 = arith.mulf %24, %24 : vector<8x128xf32>
    %32 = vector.shape_cast %31 : vector<8x128xf32> to vector<1x8x128xf32>
    %cst_15 = arith.constant dense<0.000000e+00> : vector<1xf32>
    %33 = vector.multi_reduction <add>, %32, %cst_15 [1, 2] : vector<1x8x128xf32> to vector<1xf32>
    %34 = vector.shape_cast %33 : vector<1xf32> to vector<1x1x1xf32>
    %35 = vector.extract %34[0, 0, 0] : f32 from vector<1x1x1xf32>
    %cst_16 = arith.constant 9.765625E-4 : f32
    %36 = arith.mulf %30, %cst_16 : f32
    %cst_17 = arith.constant 9.765625E-4 : f32
    %37 = arith.mulf %35, %cst_17 : f32
    %38 = arith.mulf %36, %36 : f32
    %39 = arith.subf %37, %38 : f32
    %cst_18 = arith.constant 9.99999974E-6 : f32
    %40 = arith.addf %39, %cst_18 : f32
    %41 = math.rsqrt %40 : f32
    %42 = vector.broadcast %36 : f32 to vector<8x128xf32>
    %43 = arith.subf %24, %42 : vector<8x128xf32>
    %44 = vector.broadcast %41 : f32 to vector<8x128xf32>
    %45 = arith.mulf %43, %44 : vector<8x128xf32>
    %46 = vector.broadcast %25 : vector<8x1xf32> to vector<8x128xf32>
    %47 = arith.mulf %45, %46 : vector<8x128xf32>
    %48 = vector.broadcast %26 : vector<8x1xf32> to vector<8x128xf32>
    %49 = arith.addf %47, %48 : vector<8x128xf32>
    %cst_19 = arith.constant 5.000000e-01 : f32
    %50 = vector.broadcast %cst_19 : f32 to vector<8x128xf32>
    %51 = arith.mulf %50, %49 : vector<8x128xf32>
    %cst_20 = arith.constant 0.707106769 : f32
    %52 = vector.broadcast %cst_20 : f32 to vector<8x128xf32>
    %53 = arith.mulf %49, %52 : vector<8x128xf32>
    %54 = math.erf %53 : vector<8x128xf32>
    %cst_21 = arith.constant 1.000000e+00 : f32
    %55 = vector.broadcast %cst_21 : f32 to vector<8x128xf32>
    %56 = arith.addf %55, %54 : vector<8x128xf32>
    %57 = arith.mulf %51, %56 : vector<8x128xf32>
    %58 = tpu.iota {dimensions = array<i32: 1>} : vector<8x128xi32>
    %c0_i32_22 = arith.constant 0 : i32
    %59 = vector.broadcast %c0_i32_22 : i32 to vector<8x128xi32>
    %60 = arith.cmpi eq, %58, %59 : vector<8x128xi32>
    %c1_i32_23 = arith.constant 1 : i32
    %61 = tpu.dynamic_rotate %57 by %c1_i32_23 dim 1 : vector<8x128xf32>, i32 -> vector<8x128xf32>
    %cst_24 = arith.constant 0.000000e+00 : f32
    %62 = vector.broadcast %cst_24 : f32 to vector<8x128xf32>
    %63 = arith.select %60, %62, %61 : vector<8x128xi1>, vector<8x128xf32>
    %c127_i32_25 = arith.constant 127 : i32
    %64 = vector.broadcast %c127_i32_25 : i32 to vector<8x128xi32>
    %65 = arith.cmpi eq, %58, %64 : vector<8x128xi32>
    %c127_i32_26 = arith.constant 127 : i32
    %66 = tpu.dynamic_rotate %57 by %c127_i32_26 dim 1 : vector<8x128xf32>, i32 -> vector<8x128xf32>
    %cst_27 = arith.constant 0.000000e+00 : f32
    %67 = vector.broadcast %cst_27 : f32 to vector<8x128xf32>
    %68 = arith.select %65, %67, %66 : vector<8x128xi1>, vector<8x128xf32>
    %c0_28 = arith.constant 0 : index
    %c0_29 = arith.constant 0 : index
    %c0_30 = arith.constant 0 : index
    %69 = vector.load %arg5[%c0_28, %c0_29, %c0_30] : memref<3x8x8xf32, #tpu.memory_space<vmem>>, vector<3x8x8xf32>
    %70 = vector.extract_strided_slice %69 {offsets = [0, 0, 0], sizes = [1, 8, 8], strides = [1, 1, 1]} : vector<3x8x8xf32> to vector<1x8x8xf32>
    %71 = vector.shape_cast %70 : vector<1x8x8xf32> to vector<8x8xf32>
    %cst_31 = arith.constant dense<0.000000e+00> : vector<8x128xf32>
    %72 = tpu.matmul %71, %63, %cst_31 {dimension_numbers = #tpu.dot_dimension_numbers<[1], [0], [0], [1], [0, 0, 1, 1], [], []>} : vector<8x8xf32>, vector<8x128xf32>, vector<8x128xf32> -> vector<8x128xf32>
    %73 = vector.extract_strided_slice %69 {offsets = [1, 0, 0], sizes = [1, 8, 8], strides = [1, 1, 1]} : vector<3x8x8xf32> to vector<1x8x8xf32>
    %74 = vector.shape_cast %73 : vector<1x8x8xf32> to vector<8x8xf32>
    %cst_32 = arith.constant dense<0.000000e+00> : vector<8x128xf32>
    %75 = tpu.matmul %74, %57, %cst_32 {dimension_numbers = #tpu.dot_dimension_numbers<[1], [0], [0], [1], [0, 0, 1, 1], [], []>} : vector<8x8xf32>, vector<8x128xf32>, vector<8x128xf32> -> vector<8x128xf32>
    %76 = arith.addf %72, %75 : vector<8x128xf32>
    %77 = vector.extract_strided_slice %69 {offsets = [2, 0, 0], sizes = [1, 8, 8], strides = [1, 1, 1]} : vector<3x8x8xf32> to vector<1x8x8xf32>
    %78 = vector.shape_cast %77 : vector<1x8x8xf32> to vector<8x8xf32>
    %cst_33 = arith.constant dense<0.000000e+00> : vector<8x128xf32>
    %79 = tpu.matmul %78, %68, %cst_33 {dimension_numbers = #tpu.dot_dimension_numbers<[1], [0], [0], [1], [0, 0, 1, 1], [], []>} : vector<8x8xf32>, vector<8x128xf32>, vector<8x128xf32> -> vector<8x128xf32>
    %80 = arith.addf %76, %79 : vector<8x128xf32>
    %c0_34 = arith.constant 0 : index
    %c0_35 = arith.constant 0 : index
    %81 = vector.load %arg6[%c0_34, %c0_35] : memref<8x1xf32, #tpu.memory_space<vmem>>, vector<8x1xf32>
    %c0_36 = arith.constant 0 : index
    %c0_37 = arith.constant 0 : index
    %82 = vector.load %arg7[%c0_36, %c0_37] : memref<8x1xf32, #tpu.memory_space<vmem>>, vector<8x1xf32>
    %83 = vector.shape_cast %80 : vector<8x128xf32> to vector<1x8x128xf32>
    %cst_38 = arith.constant dense<0.000000e+00> : vector<1xf32>
    %84 = vector.multi_reduction <add>, %83, %cst_38 [1, 2] : vector<1x8x128xf32> to vector<1xf32>
    %85 = vector.shape_cast %84 : vector<1xf32> to vector<1x1x1xf32>
    %86 = vector.extract %85[0, 0, 0] : f32 from vector<1x1x1xf32>
    %87 = arith.mulf %80, %80 : vector<8x128xf32>
    %88 = vector.shape_cast %87 : vector<8x128xf32> to vector<1x8x128xf32>
    %cst_39 = arith.constant dense<0.000000e+00> : vector<1xf32>
    %89 = vector.multi_reduction <add>, %88, %cst_39 [1, 2] : vector<1x8x128xf32> to vector<1xf32>
    %90 = vector.shape_cast %89 : vector<1xf32> to vector<1x1x1xf32>
    %91 = vector.extract %90[0, 0, 0] : f32 from vector<1x1x1xf32>
    %cst_40 = arith.constant 9.765625E-4 : f32
    %92 = arith.mulf %86, %cst_40 : f32
    %cst_41 = arith.constant 9.765625E-4 : f32
    %93 = arith.mulf %91, %cst_41 : f32
    %94 = arith.mulf %92, %92 : f32
    %95 = arith.subf %93, %94 : f32
    %cst_42 = arith.constant 9.99999974E-6 : f32
    %96 = arith.addf %95, %cst_42 : f32
    %97 = math.rsqrt %96 : f32
    %98 = vector.broadcast %92 : f32 to vector<8x128xf32>
    %99 = arith.subf %80, %98 : vector<8x128xf32>
    %100 = vector.broadcast %97 : f32 to vector<8x128xf32>
    %101 = arith.mulf %99, %100 : vector<8x128xf32>
    %102 = vector.broadcast %81 : vector<8x1xf32> to vector<8x128xf32>
    %103 = arith.mulf %101, %102 : vector<8x128xf32>
    %104 = vector.broadcast %82 : vector<8x1xf32> to vector<8x128xf32>
    %105 = arith.addf %103, %104 : vector<8x128xf32>
    %c0_43 = arith.constant 0 : index
    %c0_44 = arith.constant 0 : index
    %c0_45 = arith.constant 0 : index
    %106 = vector.load %arg8[%c0_43, %c0_44, %c0_45] : memref<1x8x128xf32, #tpu.memory_space<vmem>>, vector<1x8x128xf32>
    %107 = vector.shape_cast %106 : vector<1x8x128xf32> to vector<8x128xf32>
    %108 = vector.shape_cast %105 : vector<8x128xf32> to vector<1x8x128xf32>
    tpu.vector_store %arg8[%c0_43, %c0_44, %c0_45], %108 {strides = array<i32>} : memref<1x8x128xf32, #tpu.memory_space<vmem>>, vector<1x8x128xf32>,
    return
  }
  func.func @transform_0(%arg0: i32) -> (i32, i32, i32) {
    %c0_i32 = arith.constant 0 : i32
    %c0_i32_0 = arith.constant 0 : i32
    %c0_i32_1 = arith.constant 0 : i32
    return %arg0, %c0_i32, %c0_i32_0 : i32, i32, i32
  }
  func.func @transform_1(%arg0: i32) -> (i32, i32, i32) {
    %c0_i32 = arith.constant 0 : i32
    %c0_i32_0 = arith.constant 0 : i32
    %c0_i32_1 = arith.constant 0 : i32
    %c0_i32_2 = arith.constant 0 : i32
    return %c0_i32, %c0_i32_0, %c0_i32_1 : i32, i32, i32
  }
  func.func @transform_2(%arg0: i32) -> (i32, i32) {
    %c0_i32 = arith.constant 0 : i32
    %c0_i32_0 = arith.constant 0 : i32
    %c0_i32_1 = arith.constant 0 : i32
    return %c0_i32, %c0_i32_0 : i32, i32
  }
  func.func @transform_3(%arg0: i32) -> (i32, i32) {
    %c0_i32 = arith.constant 0 : i32
    %c0_i32_0 = arith.constant 0 : i32
    %c0_i32_1 = arith.constant 0 : i32
    return %c0_i32, %c0_i32_0 : i32, i32
  }
  func.func @transform_4(%arg0: i32) -> (i32, i32, i32) {
    %c0_i32 = arith.constant 0 : i32
    %c0_i32_0 = arith.constant 0 : i32
    %c0_i32_1 = arith.constant 0 : i32
    %c0_i32_2 = arith.constant 0 : i32
    return %c0_i32, %c0_i32_0, %c0_i32_1 : i32, i32, i32
  }
  func.func @transform_5(%arg0: i32) -> (i32, i32) {
    %c0_i32 = arith.constant 0 : i32
    %c0_i32_0 = arith.constant 0 : i32
    %c0_i32_1 = arith.constant 0 : i32
    return %c0_i32, %c0_i32_0 : i32, i32
  }
  func.func @transform_6(%arg0: i32) -> (i32, i32) {
    %c0_i32 = arith.constant 0 : i32
    %c0_i32_0 = arith.constant 0 : i32
    %c0_i32_1 = arith.constant 0 : i32
    return %c0_i32, %c0_i32_0 : i32, i32
  }
  func.func @transform_7(%arg0: i32) -> (i32, i32, i32) {
    %c0_i32 = arith.constant 0 : i32
    %c0_i32_0 = arith.constant 0 : i32
    %c0_i32_1 = arith.constant 0 : i32
    return %arg0, %c0_i32, %c0_i32_0 : i32, i32, i32
  }
}

</mosaic_0001>

<llo_original>
// kernel: tpu_custom_call.1
$region0: #{tpu_custom_call.1}
  #allocation0 [shape = 'u32[]', space=smem, size = 0x4, offset = 0x4, fixed_abs, tag = 'smem constant byte address 0x4 - core index']
  #allocation1 [shape = 'u32[144,128]{1,0:T(1,128)}', space=vmem, size = 0x12000, scoped, tag = 'internal scratch']
  %s0 = inlined_call_operand.vmem [shape: f32[2,4,128], index: 0, kind: input, shape index: {}]
  %s1 = inlined_call_operand.vmem [shape: f32[3,8,4], index: 1, kind: input, shape index: {}]
  %s2 = inlined_call_operand.vmem [shape: f32[8,1], index: 2, kind: input, shape index: {}]
  %s3 = inlined_call_operand.vmem [shape: f32[8,1], index: 3, kind: input, shape index: {}]
  %s4 = inlined_call_operand.vmem [shape: f32[3,8,8], index: 4, kind: input, shape index: {}]
  %s5 = inlined_call_operand.vmem [shape: f32[8,1], index: 5, kind: input, shape index: {}]
  %s6 = inlined_call_operand.vmem [shape: f32[8,1], index: 6, kind: input, shape index: {}]
  %s7 = inlined_call_operand.hbm [shape: f32[2,8,128], index: 7, kind: output, shape index: {}]
  %s8 = sld [smem:[#allocation0]]
  $region61: #{tpu_custom_call.1} parent=0
    _
  %s10 = ssub.s32 1, %s8
  %s11 = scalar_select 0, %s10, %s8
  $region1: #{tpu_custom_call.1} parent=0
    #allocation2 [shape = 'u8[8192]{0}', space=vmem, size = 0x2000, scoped, tag = 'output window, operand 0']
    #allocation3 [shape = 's32[2]{0}', space=sflag, size = 0x8, scoped, tag = 'scoped memory for tpu_custom_call.1']
    %12 = vsyncpa [#allocation3], 0
    %s13 = scalar_lea.sflag [#allocation3], 1
    %14 = vsyncpa %s13, 0
    loop: start=0, step=1, limit=4
    $region2: #{tpu_custom_call.1} parent=1 // loop_pre_header
      _
    $region3: #{tpu_custom_call.1} parent=1 // loop_header
      %s16 = sphi 0, %s20
      %p17 = scmp.ge.s32.totalorder %s16, 4
      %s26 = sphi 0, %s28
      %s29 = sphi 0, %s26
      %s30 = sphi 0, %s29
      %s46 = sphi 0, %s30
      %s50 = sphi 0, %s50
      %s52 = sphi 0, %s50
      %s53 = sphi 0, %s52
      %s67 = sphi 0, %s53
      %s71 = sphi 0, %s71
      %s73 = sphi 0, %s71
      %s74 = sphi 0, %s73
      %s88 = sphi 0, %s74
      %s92 = sphi 0, %s92
      %s94 = sphi 0, %s92
      %s95 = sphi 0, %s94
      %s109 = sphi 0, %s95
      %s113 = sphi 0, %s113
      %s115 = sphi 0, %s113
      %s116 = sphi 0, %s115
      %s130 = sphi 0, %s116
      %s134 = sphi 0, %s134
      %s136 = sphi 0, %s134
      %s137 = sphi 0, %s136
      %s151 = sphi 0, %s137
      %s155 = sphi 0, %s155
      %s157 = sphi 0, %s155
      %s158 = sphi 0, %s157
      %s172 = sphi 0, %s158
      %s178 = sphi 0, %s180
      %s181 = sphi 0, %s178
      %s182 = sphi 0, %s181
      %s198 = sphi 0, %s182
    $region4: #{tpu_custom_call.1} parent=1 // loop_header_branch
      %19 = sbr.rel (%p17) target = $region8
    $region5: #{tpu_custom_call.1} parent=1 // loop_body
      %s21 = ssub.s32 %s16, 1
      %s22 = ssub.s32 %s16, 2
      %s23 = sadd.s32 %s16, 1
      %s24 = ssub.s32 %s16, %s23
      %p25 = scmp.eq.s32.totalorder %s24, 0
      %s27 = sadd.s32 %s26, 1
      %s28 = scalar_select %p25, %s26, %s27
      %p31 = pneg %p25
      %p32 = scmp.eq.s32.totalorder %s16, 1
      %p33 = por %p31, %p32
      %p34 = scmp.ne.s32.totalorder %s26, %s29
      %p35 = scmp.eq.s32.totalorder %s16, 0
      %p36 = por %p34, %p35
      %p37 = scmp.ne.s32.totalorder %s26, %s29
      %p38 = scmp.eq.s32.totalorder %s21, 1
      %p39 = por %p37, %p38
      %p40 = scmp.ne.s32.totalorder %s29, %s30
      %p41 = scmp.eq.s32.totalorder %s21, 0
      %p42 = por %p40, %p41
      %p43 = scmp.ne.s32.totalorder %s29, %s30
      %p44 = scmp.eq.s32.totalorder %s22, 1
      %p45 = por %p43, %p44
      %p47 = scmp.ne.s32.totalorder %s30, %s46
      %p48 = scmp.eq.s32.totalorder %s22, 0
      %p49 = por %p47, %p48
      %s51 = sadd.s32 %s50, 1
      %p54 = scmp.eq.s32.totalorder %s16, 1
      %p55 = scmp.ne.s32.totalorder %s50, %s52
      %p56 = scmp.eq.s32.totalorder %s16, 0
      %p57 = por %p55, %p56
      %p58 = scmp.ne.s32.totalorder %s50, %s52
      %p59 = scmp.eq.s32.totalorder %s21, 1
      %p60 = por %p58, %p59
      %p61 = scmp.ne.s32.totalorder %s52, %s53
      %p62 = scmp.eq.s32.totalorder %s21, 0
      %p63 = por %p61, %p62
      %p64 = scmp.ne.s32.totalorder %s52, %s53
      %p65 = scmp.eq.s32.totalorder %s22, 1
      %p66 = por %p64, %p65
      %p68 = scmp.ne.s32.totalorder %s53, %s67
      %p69 = scmp.eq.s32.totalorder %s22, 0
      %p70 = por %p68, %p69
      %s72 = sadd.s32 %s71, 1
      %p75 = scmp.eq.s32.totalorder %s16, 1
      %p76 = scmp.ne.s32.totalorder %s71, %s73
      %p77 = scmp.eq.s32.totalorder %s16, 0
      %p78 = por %p76, %p77
      %p79 = scmp.ne.s32.totalorder %s71, %s73
      %p80 = scmp.eq.s32.totalorder %s21, 1
      %p81 = por %p79, %p80
      %p82 = scmp.ne.s32.totalorder %s73, %s74
      %p83 = scmp.eq.s32.totalorder %s21, 0
      %p84 = por %p82, %p83
      %p85 = scmp.ne.s32.totalorder %s73, %s74
      %p86 = scmp.eq.s32.totalorder %s22, 1
      %p87 = por %p85, %p86
      %p89 = scmp.ne.s32.totalorder %s74, %s88
      %p90 = scmp.eq.s32.totalorder %s22, 0
      %p91 = por %p89, %p90
      %s93 = sadd.s32 %s92, 1
      %p96 = scmp.eq.s32.totalorder %s16, 1
      %p97 = scmp.ne.s32.totalorder %s92, %s94
      %p98 = scmp.eq.s32.totalorder %s16, 0
      %p99 = por %p97, %p98
      %p100 = scmp.ne.s32.totalorder %s92, %s94
      %p101 = scmp.eq.s32.totalorder %s21, 1
      %p102 = por %p100, %p101
      %p103 = scmp.ne.s32.totalorder %s94, %s95
      %p104 = scmp.eq.s32.totalorder %s21, 0
      %p105 = por %p103, %p104
      %p106 = scmp.ne.s32.totalorder %s94, %s95
      %p107 = scmp.eq.s32.totalorder %s22, 1
      %p108 = por %p106, %p107
      %p110 = scmp.ne.s32.totalorder %s95, %s109
      %p111 = scmp.eq.s32.totalorder %s22, 0
      %p112 = por %p110, %p111
      %s114 = sadd.s32 %s113, 1
      %p117 = scmp.eq.s32.totalorder %s16, 1
      %p118 = scmp.ne.s32.totalorder %s113, %s115
      %p119 = scmp.eq.s32.totalorder %s16, 0
      %p120 = por %p118, %p119
      %p121 = scmp.ne.s32.totalorder %s113, %s115
      %p122 = scmp.eq.s32.totalorder %s21, 1
      %p123 = por %p121, %p122
      %p124 = scmp.ne.s32.totalorder %s115, %s116
      %p125 = scmp.eq.s32.totalorder %s21, 0
      %p126 = por %p124, %p125
      %p127 = scmp.ne.s32.totalorder %s115, %s116
      %p128 = scmp.eq.s32.totalorder %s22, 1
      %p129 = por %p127, %p128
      %p131 = scmp.ne.s32.totalorder %s116, %s130
      %p132 = scmp.eq.s32.totalorder %s22, 0
      %p133 = por %p131, %p132
      %s135 = sadd.s32 %s134, 1
      %p138 = scmp.eq.s32.totalorder %s16, 1
      %p139 = scmp.ne.s32.totalorder %s134, %s136
      %p140 = scmp.eq.s32.totalorder %s16, 0
      %p141 = por %p139, %p140
      %p142 = scmp.ne.s32.totalorder %s134, %s136
      %p143 = scmp.eq.s32.totalorder %s21, 1
      %p144 = por %p142, %p143
      %p145 = scmp.ne.s32.totalorder %s136, %s137
      %p146 = scmp.eq.s32.totalorder %s21, 0
      %p147 = por %p145, %p146
      %p148 = scmp.ne.s32.totalorder %s136, %s137
      %p149 = scmp.eq.s32.totalorder %s22, 1
      %p150 = por %p148, %p149
      %p152 = scmp.ne.s32.totalorder %s137, %s151
      %p153 = scmp.eq.s32.totalorder %s22, 0
      %p154 = por %p152, %p153
      %s156 = sadd.s32 %s155, 1
      %p159 = scmp.eq.s32.totalorder %s16, 1
      %p160 = scmp.ne.s32.totalorder %s155, %s157
      %p161 = scmp.eq.s32.totalorder %s16, 0
      %p162 = por %p160, %p161
      %p163 = scmp.ne.s32.totalorder %s155, %s157
      %p164 = scmp.eq.s32.totalorder %s21, 1
      %p165 = por %p163, %p164
      %p166 = scmp.ne.s32.totalorder %s157, %s158
      %p167 = scmp.eq.s32.totalorder %s21, 0
      %p168 = por %p166, %p167
      %p169 = scmp.ne.s32.totalorder %s157, %s158
      %p170 = scmp.eq.s32.totalorder %s22, 1
      %p171 = por %p169, %p170
      %p173 = scmp.ne.s32.totalorder %s158, %s172
      %p174 = scmp.eq.s32.totalorder %s22, 0
      %p175 = por %p173, %p174
      %s176 = ssub.s32 %s16, %s23
      %p177 = scmp.eq.s32.totalorder %s176, 0
      %s179 = sadd.s32 %s178, 1
      %s180 = scalar_select %p177, %s178, %s179
      %p183 = pneg %p177
      %p184 = scmp.eq.s32.totalorder %s16, 1
      %p185 = por %p183, %p184
      %p186 = scmp.ne.s32.totalorder %s178, %s181
      %p187 = scmp.eq.s32.totalorder %s16, 0
      %p188 = por %p186, %p187
      %p189 = scmp.ne.s32.totalorder %s178, %s181
      %p190 = scmp.eq.s32.totalorder %s21, 1
      %p191 = por %p189, %p190
      %p192 = scmp.ne.s32.totalorder %s181, %s182
      %p193 = scmp.eq.s32.totalorder %s21, 0
      %p194 = por %p192, %p193
      %p195 = scmp.ne.s32.totalorder %s181, %s182
      %p196 = scmp.eq.s32.totalorder %s22, 1
      %p197 = por %p195, %p196
      %p199 = scmp.ne.s32.totalorder %s182, %s198
      %p200 = scmp.eq.s32.totalorder %s22, 0
      %p201 = por %p199, %p200
      %p202 = scmp.le.s32.totalorder 1, %s16
      %p203 = scmp.lt.s32.totalorder %s16, 3
      %p204 = pnand %p202, %p203
      %p205 = pneg %p204
      // Predicated region
      $region9: #{tpu_custom_call.1} parent=5 // pred_check
        _
      $region10: #{tpu_custom_call.1} parent=5 // pred_check_branch
        %207 = sbr.rel (%p204) target = $region12
      $region11: #{tpu_custom_call.1} parent=5 // pred_region
        %s208 = ssub.s32 %s16, 1
        // Predicated region
        $region13: #{tpu_custom_call.1} parent=11 // pred_check
          %p209 = pneg %p63
        $region14: #{tpu_custom_call.1} parent=11 // pred_check_branch
          %211 = sbr.rel (%p209) target = $region16
        $region15: #{tpu_custom_call.1} parent=11 // pred_region
          _
        $region16: #{tpu_custom_call.1} parent=11 // pred_fallthru
          _
        // Predicated region
        $region17: #{tpu_custom_call.1} parent=11 // pred_check
          %p212 = pneg %p84
        $region18: #{tpu_custom_call.1} parent=11 // pred_check_branch
          %214 = sbr.rel (%p212) target = $region20
        $region19: #{tpu_custom_call.1} parent=11 // pred_region
          _
        $region20: #{tpu_custom_call.1} parent=11 // pred_fallthru
          _
        // Predicated region
        $region21: #{tpu_custom_call.1} parent=11 // pred_check
          %p215 = pneg %p105
        $region22: #{tpu_custom_call.1} parent=11 // pred_check_branch
          %217 = sbr.rel (%p215) target = $region24
        $region23: #{tpu_custom_call.1} parent=11 // pred_region
          _
        $region24: #{tpu_custom_call.1} parent=11 // pred_fallthru
          _
        // Predicated region
        $region25: #{tpu_custom_call.1} parent=11 // pred_check
          %p218 = pneg %p126
        $region26: #{tpu_custom_call.1} parent=11 // pred_check_branch
          %220 = sbr.rel (%p218) target = $region28
        $region27: #{tpu_custom_call.1} parent=11 // pred_region
          _
        $region28: #{tpu_custom_call.1} parent=11 // pred_fallthru
          _
        // Predicated region
        $region29: #{tpu_custom_call.1} parent=11 // pred_check
          %p221 = pneg %p147
        $region30: #{tpu_custom_call.1} parent=11 // pred_check_branch
          %223 = sbr.rel (%p221) target = $region32
        $region31: #{tpu_custom_call.1} parent=11 // pred_region
          _
        $region32: #{tpu_custom_call.1} parent=11 // pred_fallthru
          _
        // Predicated region
        $region33: #{tpu_custom_call.1} parent=11 // pred_check
          %p224 = pneg %p168
        $region34: #{tpu_custom_call.1} parent=11 // pred_check_branch
          %226 = sbr.rel (%p224) target = $region36
        $region35: #{tpu_custom_call.1} parent=11 // pred_region
          _
        $region36: #{tpu_custom_call.1} parent=11 // pred_fallthru
          _
      $region12: #{tpu_custom_call.1} parent=5 // pred_fallthru
        _
      %p227 = scmp.lt.s32.totalorder %s16, 2
      // Predicated region
      $region37: #{tpu_custom_call.1} parent=5 // pred_check
        %p228 = pneg %p227
      $region38: #{tpu_custom_call.1} parent=5 // pred_check_branch
        %230 = sbr.rel (%p228) target = $region40
      $region39: #{tpu_custom_call.1} parent=5 // pred_region
        // Predicated region
        $region41: #{tpu_custom_call.1} parent=39 // pred_check
          %p231 = pneg %p36
        $region42: #{tpu_custom_call.1} parent=39 // pred_check_branch
          %233 = sbr.rel (%p231) target = $region44
        $region43: #{tpu_custom_call.1} parent=39 // pred_region
          %p234 = scmp.lt.s32.totalorder %s16, 1
          %s235 = scalar_select %p234, %s16, 1
          %s236 = smul.addr %s235, 4
          %s237 = scalar_lea.vmem %s0, %s236
        $region44: #{tpu_custom_call.1} parent=39 // pred_fallthru
          _
      $region40: #{tpu_custom_call.1} parent=5 // pred_fallthru
        _
      %p238 = scmp.le.s32.totalorder 1, %s16
      %p239 = scmp.lt.s32.totalorder %s16, 3
      %p240 = pnand %p238, %p239
      %p241 = pneg %p240
      // Predicated region
      $region45: #{tpu_custom_call.1} parent=5 // pred_check
        _
      $region46: #{tpu_custom_call.1} parent=5 // pred_check_branch
        %243 = sbr.rel (%p240) target = $region48
      $region47: #{tpu_custom_call.1} parent=5 // pred_region
        %s244 = ssub.s32 %s16, 1
        %p245 = scmp.lt.s32.totalorder %s21, 1
        %s246 = scalar_select %p245, %s21, 1
        %s247 = smul.addr %s246, 4
        %s248 = scalar_lea.vmem %s0, %s247
        %p249 = pneg %p42
        %p250 = pneg %p39
        %p251 = pneg %p63
        %p252 = pneg %p60
        %p253 = pneg %p84
        %p254 = pneg %p81
        %p255 = pneg %p105
        %p256 = pneg %p102
        %p257 = pneg %p126
        %p258 = pneg %p123
        %p259 = pneg %p147
        %p260 = pneg %p144
        %p261 = pneg %p168
        %p262 = pneg %p165
        %p263 = pneg %p194
        %p264 = pneg %p191
        %s265 = sand.u32 %s181, 1
        %s266 = scalar_lea.sflag [#allocation3], %s265
        %s267 = sand.u32 %s181, 1
        %s268 = smul.addr %s267, 8
        %s269 = scalar_lea.vmem [#allocation2], %s268
        %p270 = scmp.lt.s32.totalorder %s21, 1
        %s271 = scalar_select %p270, %s21, 1
        %s272 = smul.addr %s271, 4
        %s273 = scalar_lea.vmem %s0, %s272
        %v274 = vld [vmem:[%s273] sm:$0xf]
        %v275 = vlaneseq
        %v276 = vand.u32 %v275, 127
        %vm277 = vcmp.eq.s32.totalorder %v276, 0
        %278 = vrot.lane.b32.xlu0 %v274, 1
        %v279 = vpop.permute.xlu0 %278
        %v280 = vsel %vm277, 0.0, %v279
        %vm281 = vcmp.eq.s32.totalorder %v276, 127
        %282 = vrot.lane.b32.xlu0 %v274, 127
        %v283 = vpop.permute.xlu0 %282
        %v284 = vsel %vm281, 0.0, %v283
        %v285 = vld [vmem:[%s1] sm:$0xff]
        %v286 = vld [vmem:[%s1 + $0x8] sm:$0xff]
        %v287 = vld [vmem:[%s1 + $0x10] sm:$0xff]
        %vm288 = vcmask 31744
        %v290 = vsel %vm288, %v286, 0
        %vm292 = vcmask 1043456
        %v294 = vsel %vm292, %v274, 0
        %296 = vmatprep.subr.mxu0 0.0
        %297 = vmatpush1.msra.mxu0 %v294
        %298 = vmatprep.subr.mxu0 0.0
        %299 = vmatpush1.msra.mxu0 0.0
        %300 = vmatprep.subr.mxu0 0.0
        %301 = vmatpush1.msra.mxu0 0.0
        %302 = vmatprep.subr.mxu0 0.0
        %303 = vmatpush1.msra.mxu0 0.0
        %304 = vmatprep.subr.mxu0 0.0
        %305 = vmatpush1.msra.mxu0 0.0
        %306 = vmatprep.subr.mxu0 0.0
        %307 = vmatpush1.msra.mxu0 0.0
        %308 = vmatprep.subr.mxu0 0.0
        %309 = vmatpush1.msra.mxu0 0.0
        %310 = vmatprep.subr.mxu0 0.0
        %311 = vmatpush1.msra.mxu0 0.0
        %312 = vmatprep.subr.mxu0 0.0
        %313 = vmatpush1.msra.mxu0 0.0
        %314 = vmatprep.subr.mxu0 0.0
        %315 = vmatpush1.msra.mxu0 0.0
        %316 = vmatprep.subr.mxu0 0.0
        %317 = vmatpush1.msra.mxu0 0.0
        %318 = vmatprep.subr.mxu0 0.0
        %319 = vmatpush1.msra.mxu0 0.0
        %320 = vmatprep.subr.mxu0 0.0
        %321 = vmatpush1.msra.mxu0 0.0
        %322 = vmatprep.subr.mxu0 0.0
        %323 = vmatpush1.msra.mxu0 0.0
        %324 = vmatprep.subr.mxu0 0.0
        %325 = vmatpush1.msra.mxu0 0.0
        %326 = vmatprep.subr.mxu0 0.0
        %327 = vmatpush1.msra.mxu0 0.0
        %328 = vmatprep.subr.mxu0 0.0
        %329 = vmatpush1.msra.mxu0 0.0
        %330 = vmatprep.subr.mxu0 0.0
        %331 = vmatpush1.msra.mxu0 0.0
        %332 = vmatprep.subr.mxu0 0.0
        %333 = vmatpush1.msra.mxu0 0.0
        %334 = vmatprep.subr.mxu0 0.0
        %335 = vmatpush1.msra.mxu0 0.0
        %336 = vmatprep.subr.mxu0 0.0
        %337 = vmatpush1.msra.mxu0 0.0
        %338 = vmatprep.subr.mxu0 0.0
        %339 = vmatpush1.msra.mxu0 0.0
        %340 = vmatprep.subr.mxu0 0.0
        %341 = vmatpush1.msra.mxu0 0.0
        %342 = vmatprep.subr.mxu0 0.0
        %343 = vmatpush1.msra.mxu0 0.0
        %344 = vmatprep.subr.mxu0 0.0
        %345 = vmatpush1.msra.mxu0 0.0
        %346 = vmatprep.subr.mxu0 0.0
        %347 = vmatpush1.msra.mxu0 0.0
        %348 = vmatprep.subr.mxu0 0.0
        %349 = vmatpush1.msra.mxu0 0.0
        %350 = vmatprep.subr.mxu0 0.0
        %351 = vmatpush1.msra.mxu0 0.0
        %352 = vmatprep.subr.mxu0 0.0
        %353 = vmatpush1.msra.mxu0 0.0
        %354 = vmatprep.subr.mxu0 0.0
        %355 = vmatpush1.msra.mxu0 0.0
        %356 = vmatprep.subr.mxu0 0.0
        %357 = vmatpush1.msra.mxu0 0.0
        %358 = vmatprep.subr.mxu0 0.0
        %359 = vmatpush1.msra.mxu0 0.0
        %360 = vmatprep.mubr.f32.mxu0 0.0
        %361 = vmatmul.mubr.f32.gmra.mrb[0].mxu0 %v290
        %v362 = vpop.f32.mrb[0].mxu0
        %v363 = vadd.f32 0.0, %v362
        %v364 = vpop.f32.mrb[0].mxu0
        %365 = vdwg.mxu0
        %v367 = vsel %vm288, %v285, 0
        %v370 = vsel %vm292, %v280, 0
        %372 = vmatprep.subr.mxu0 0.0
        %373 = vmatpush1.msra.mxu0 %v370
        %374 = vmatprep.subr.mxu0 0.0
        %375 = vmatpush1.msra.mxu0 0.0
        %376 = vmatprep.subr.mxu0 0.0
        %377 = vmatpush1.msra.mxu0 0.0
        %378 = vmatprep.subr.mxu0 0.0
        %379 = vmatpush1.msra.mxu0 0.0
        %380 = vmatprep.subr.mxu0 0.0
        %381 = vmatpush1.msra.mxu0 0.0
        %382 = vmatprep.subr.mxu0 0.0
        %383 = vmatpush1.msra.mxu0 0.0
        %384 = vmatprep.subr.mxu0 0.0
        %385 = vmatpush1.msra.mxu0 0.0
        %386 = vmatprep.subr.mxu0 0.0
        %387 = vmatpush1.msra.mxu0 0.0
        %388 = vmatprep.subr.mxu0 0.0
        %389 = vmatpush1.msra.mxu0 0.0
        %390 = vmatprep.subr.mxu0 0.0
        %391 = vmatpush1.msra.mxu0 0.0
        %392 = vmatprep.subr.mxu0 0.0
        %393 = vmatpush1.msra.mxu0 0.0
        %394 = vmatprep.subr.mxu0 0.0
        %395 = vmatpush1.msra.mxu0 0.0
        %396 = vmatprep.subr.mxu0 0.0
        %397 = vmatpush1.msra.mxu0 0.0
        %398 = vmatprep.subr.mxu0 0.0
        %399 = vmatpush1.msra.mxu0 0.0
        %400 = vmatprep.subr.mxu0 0.0
        %401 = vmatpush1.msra.mxu0 0.0
        %402 = vmatprep.subr.mxu0 0.0
        %403 = vmatpush1.msra.mxu0 0.0
        %404 = vmatprep.subr.mxu0 0.0
        %405 = vmatpush1.msra.mxu0 0.0
        %406 = vmatprep.subr.mxu0 0.0
        %407 = vmatpush1.msra.mxu0 0.0
        %408 = vmatprep.subr.mxu0 0.0
        %409 = vmatpush1.msra.mxu0 0.0
        %410 = vmatprep.subr.mxu0 0.0
        %411 = vmatpush1.msra.mxu0 0.0
        %412 = vmatprep.subr.mxu0 0.0
        %413 = vmatpush1.msra.mxu0 0.0
        %414 = vmatprep.subr.mxu0 0.0
        %415 = vmatpush1.msra.mxu0 0.0
        %416 = vmatprep.subr.mxu0 0.0
        %417 = vmatpush1.msra.mxu0 0.0
        %418 = vmatprep.subr.mxu0 0.0
        %419 = vmatpush1.msra.mxu0 0.0
        %420 = vmatprep.subr.mxu0 0.0
        %421 = vmatpush1.msra.mxu0 0.0
        %422 = vmatprep.subr.mxu0 0.0
        %423 = vmatpush1.msra.mxu0 0.0
        %424 = vmatprep.subr.mxu0 0.0
        %425 = vmatpush1.msra.mxu0 0.0
        %426 = vmatprep.subr.mxu0 0.0
        %427 = vmatpush1.msra.mxu0 0.0
        %428 = vmatprep.subr.mxu0 0.0
        %429 = vmatpush1.msra.mxu0 0.0
        %430 = vmatprep.subr.mxu0 0.0
        %431 = vmatpush1.msra.mxu0 0.0
        %432 = vmatprep.subr.mxu0 0.0
        %433 = vmatpush1.msra.mxu0 0.0
        %434 = vmatprep.subr.mxu0 0.0
        %435 = vmatpush1.msra.mxu0 0.0
        %436 = vmatprep.mubr.f32.mxu0 0.0
        %437 = vmatmul.mubr.f32.gmra.mrb[0].mxu0 %v367
        %v438 = vpop.f32.mrb[0].mxu0
        %v439 = vadd.f32 %v363, %v438
        %v440 = vpop.f32.mrb[0].mxu0
        %441 = vdwg.mxu0
        %v443 = vsel %vm288, %v287, 0
        %v446 = vsel %vm292, %v284, 0
        %448 = vmatprep.subr.mxu0 0.0
        %449 = vmatpush1.msra.mxu0 %v446
        %450 = vmatprep.subr.mxu0 0.0
        %451 = vmatpush1.msra.mxu0 0.0
        %452 = vmatprep.subr.mxu0 0.0
        %453 = vmatpush1.msra.mxu0 0.0
        %454 = vmatprep.subr.mxu0 0.0
        %455 = vmatpush1.msra.mxu0 0.0
        %456 = vmatprep.subr.mxu0 0.0
        %457 = vmatpush1.msra.mxu0 0.0
        %458 = vmatprep.subr.mxu0 0.0
        %459 = vmatpush1.msra.mxu0 0.0
        %460 = vmatprep.subr.mxu0 0.0
        %461 = vmatpush1.msra.mxu0 0.0
        %462 = vmatprep.subr.mxu0 0.0
        %463 = vmatpush1.msra.mxu0 0.0
        %464 = vmatprep.subr.mxu0 0.0
        %465 = vmatpush1.msra.mxu0 0.0
        %466 = vmatprep.subr.mxu0 0.0
        %467 = vmatpush1.msra.mxu0 0.0
        %468 = vmatprep.subr.mxu0 0.0
        %469 = vmatpush1.msra.mxu0 0.0
        %470 = vmatprep.subr.mxu0 0.0
        %471 = vmatpush1.msra.mxu0 0.0
        %472 = vmatprep.subr.mxu0 0.0
        %473 = vmatpush1.msra.mxu0 0.0
        %474 = vmatprep.subr.mxu0 0.0
        %475 = vmatpush1.msra.mxu0 0.0
        %476 = vmatprep.subr.mxu0 0.0
        %477 = vmatpush1.msra.mxu0 0.0
        %478 = vmatprep.subr.mxu0 0.0
        %479 = vmatpush1.msra.mxu0 0.0
        %480 = vmatprep.subr.mxu0 0.0
        %481 = vmatpush1.msra.mxu0 0.0
        %482 = vmatprep.subr.mxu0 0.0
        %483 = vmatpush1.msra.mxu0 0.0
        %484 = vmatprep.subr.mxu0 0.0
        %485 = vmatpush1.msra.mxu0 0.0
        %486 = vmatprep.subr.mxu0 0.0
        %487 = vmatpush1.msra.mxu0 0.0
        %488 = vmatprep.subr.mxu0 0.0
        %489 = vmatpush1.msra.mxu0 0.0
        %490 = vmatprep.subr.mxu0 0.0
        %491 = vmatpush1.msra.mxu0 0.0
        %492 = vmatprep.subr.mxu0 0.0
        %493 = vmatpush1.msra.mxu0 0.0
        %494 = vmatprep.subr.mxu0 0.0
        %495 = vmatpush1.msra.mxu0 0.0
        %496 = vmatprep.subr.mxu0 0.0
        %497 = vmatpush1.msra.mxu0 0.0
        %498 = vmatprep.subr.mxu0 0.0
        %499 = vmatpush1.msra.mxu0 0.0
        %500 = vmatprep.subr.mxu0 0.0
        %501 = vmatpush1.msra.mxu0 0.0
        %502 = vmatprep.subr.mxu0 0.0
        %503 = vmatpush1.msra.mxu0 0.0
        %504 = vmatprep.subr.mxu0 0.0
        %505 = vmatpush1.msra.mxu0 0.0
        %506 = vmatprep.subr.mxu0 0.0
        %507 = vmatpush1.msra.mxu0 0.0
        %508 = vmatprep.subr.mxu0 0.0
        %509 = vmatpush1.msra.mxu0 0.0
        %510 = vmatprep.subr.mxu0 0.0
        %511 = vmatpush1.msra.mxu0 0.0
        %512 = vmatprep.mubr.f32.mxu0 0.0
        %513 = vmatmul.mubr.f32.gmra.mrb[0].mxu0 %v443
        %v514 = vpop.f32.mrb[0].mxu0
        %v515 = vadd.f32 0.0, %v514
        %v516 = vpop.f32.mrb[0].mxu0
        %517 = vdwg.mxu0
        %v518 = vadd.f32 %v439, %v515
        %v519 = vld [vmem:[%s2] sm:$0xff]
        %v520 = vld [vmem:[%s3] sm:$0xff]
        %521 = vadd.xlane.f32.xlu0 %v518
        %v522 = vpop.xlane.xlu0 %521
        %v523 = vrot.slane %v522, 4
        %v524 = vadd.f32 %v522, %v523
        %v525 = vrot.slane %v524, 2
        %v526 = vadd.f32 %v524, %v525
        %v527 = vrot.slane %v526, 1
        %v528 = vadd.f32 %v526, %v527
        %s529 = vtos %v528
        %v530 = vmul.f32 %v518, %v518
        %531 = vadd.xlane.f32.xlu0 %v530
        %v532 = vpop.xlane.xlu0 %531
        %v533 = vrot.slane %v532, 4
        %v534 = vadd.f32 %v532, %v533
        %v535 = vrot.slane %v534, 2
        %v536 = vadd.f32 %v534, %v535
        %v537 = vrot.slane %v536, 1
        %v538 = vadd.f32 %v536, %v537
        %s539 = vtos %v538
        %s540 = smul.f32 %s529, 0.0009765625
        %s541 = smul.f32 %s539, 0.0009765625
        %s542 = smul.f32 %s540, %s540
        %s543 = ssub.f32 %s541, %s542
        %s544 = sadd.f32 %s543, 1e-05
        %v545 = vstv %s544
        %v546 = vrsqrt.pop %v545
        %s547 = vtos %v546
        %v548 = vstv %s540
        %v549 = vsub.f32 %v518, %v548
        %v550 = vstv %s547
        %v551 = vmul.f32 %v549, %v550
        %553 = vset.pattern.permute.xlu0 0
        %554 = vperm.xlu0 %553, %v519
        %v555 = vpop.permute.xlu0 %554
        %v557 = vmul.f32 %v551, %v555
        %559 = vset.pattern.permute.xlu0 0
        %560 = vperm.xlu0 %559, %v520
        %v561 = vpop.permute.xlu0 %560
        %v563 = vadd.f32 %v557, %v561
        %v564 = vmul.f32 %v563, 0.5
        %v565 = vmul.f32 %v563, 0.70710677
        %v566 = verf.f32.pop %v565
        %v567 = vadd.f32 %v566, 1.0
        %v568 = vmul.f32 %v564, %v567
        %569 = vrot.lane.b32.xlu0 %v568, 1
        %v570 = vpop.permute.xlu0 %569
        %v571 = vsel %vm277, 0.0, %v570
        %572 = vrot.lane.b32.xlu0 %v568, 127
        %v573 = vpop.permute.xlu0 %572
        %v574 = vsel %vm281, 0.0, %v573
        %v575 = vld [vmem:[%s4] sm:$0xff]
        %v576 = vld [vmem:[%s4 + $0x8] sm:$0xff]
        %v577 = vld [vmem:[%s4 + $0x10] sm:$0xff]
        %vm578 = vcmask 64512
        %v580 = vsel %vm578, %v576, 0
        %582 = vmatprep.subr.mxu0 0.0
        %583 = vmatpush1.msra.mxu0 %v568
        %584 = vmatprep.subr.mxu0 0.0
        %585 = vmatpush1.msra.mxu0 0.0
        %586 = vmatprep.subr.mxu0 0.0
        %587 = vmatpush1.msra.mxu0 0.0
        %588 = vmatprep.subr.mxu0 0.0
        %589 = vmatpush1.msra.mxu0 0.0
        %590 = vmatprep.subr.mxu0 0.0
        %591 = vmatpush1.msra.mxu0 0.0
        %592 = vmatprep.subr.mxu0 0.0
        %593 = vmatpush1.msra.mxu0 0.0
        %594 = vmatprep.subr.mxu0 0.0
        %595 = vmatpush1.msra.mxu0 0.0
        %596 = vmatprep.subr.mxu0 0.0
        %597 = vmatpush1.msra.mxu0 0.0
        %598 = vmatprep.subr.mxu0 0.0
        %599 = vmatpush1.msra.mxu0 0.0
        %600 = vmatprep.subr.mxu0 0.0
        %601 = vmatpush1.msra.mxu0 0.0
        %602 = vmatprep.subr.mxu0 0.0
        %603 = vmatpush1.msra.mxu0 0.0
        %604 = vmatprep.subr.mxu0 0.0
        %605 = vmatpush1.msra.mxu0 0.0
        %606 = vmatprep.subr.mxu0 0.0
        %607 = vmatpush1.msra.mxu0 0.0
        %608 = vmatprep.subr.mxu0 0.0
        %609 = vmatpush1.msra.mxu0 0.0
        %610 = vmatprep.subr.mxu0 0.0
        %611 = vmatpush1.msra.mxu0 0.0
        %612 = vmatprep.subr.mxu0 0.0
        %613 = vmatpush1.msra.mxu0 0.0
        %614 = vmatprep.subr.mxu0 0.0
        %615 = vmatpush1.msra.mxu0 0.0
        %616 = vmatprep.subr.mxu0 0.0
        %617 = vmatpush1.msra.mxu0 0.0
        %618 = vmatprep.subr.mxu0 0.0
        %619 = vmatpush1.msra.mxu0 0.0
        %620 = vmatprep.subr.mxu0 0.0
        %621 = vmatpush1.msra.mxu0 0.0
        %622 = vmatprep.subr.mxu0 0.0
        %623 = vmatpush1.msra.mxu0 0.0
        %624 = vmatprep.subr.mxu0 0.0
        %625 = vmatpush1.msra.mxu0 0.0
        %626 = vmatprep.subr.mxu0 0.0
        %627 = vmatpush1.msra.mxu0 0.0
        %628 = vmatprep.subr.mxu0 0.0
        %629 = vmatpush1.msra.mxu0 0.0
        %630 = vmatprep.subr.mxu0 0.0
        %631 = vmatpush1.msra.mxu0 0.0
        %632 = vmatprep.subr.mxu0 0.0
        %633 = vmatpush1.msra.mxu0 0.0
        %634 = vmatprep.subr.mxu0 0.0
        %635 = vmatpush1.msra.mxu0 0.0
        %636 = vmatprep.subr.mxu0 0.0
        %637 = vmatpush1.msra.mxu0 0.0
        %638 = vmatprep.subr.mxu0 0.0
        %639 = vmatpush1.msra.mxu0 0.0
        %640 = vmatprep.subr.mxu0 0.0
        %641 = vmatpush1.msra.mxu0 0.0
        %642 = vmatprep.subr.mxu0 0.0
        %643 = vmatpush1.msra.mxu0 0.0
        %644 = vmatprep.subr.mxu0 0.0
        %645 = vmatpush1.msra.mxu0 0.0
        %646 = vmatprep.mubr.f32.mxu0 0.0
        %647 = vmatmul.mubr.f32.gmra.mrb[0].mxu0 %v580
        %v648 = vpop.f32.mrb[0].mxu0
        %v649 = vadd.f32 0.0, %v648
        %v650 = vpop.f32.mrb[0].mxu0
        %651 = vdwg.mxu0
        %v653 = vsel %vm578, %v575, 0
        %655 = vmatprep.subr.mxu0 0.0
        %656 = vmatpush1.msra.mxu0 %v571
        %657 = vmatprep.subr.mxu0 0.0
        %658 = vmatpush1.msra.mxu0 0.0
        %659 = vmatprep.subr.mxu0 0.0
        %660 = vmatpush1.msra.mxu0 0.0
        %661 = vmatprep.subr.mxu0 0.0
        %662 = vmatpush1.msra.mxu0 0.0
        %663 = vmatprep.subr.mxu0 0.0
        %664 = vmatpush1.msra.mxu0 0.0
        %665 = vmatprep.subr.mxu0 0.0
        %666 = vmatpush1.msra.mxu0 0.0
        %667 = vmatprep.subr.mxu0 0.0
        %668 = vmatpush1.msra.mxu0 0.0
        %669 = vmatprep.subr.mxu0 0.0
        %670 = vmatpush1.msra.mxu0 0.0
        %671 = vmatprep.subr.mxu0 0.0
        %672 = vmatpush1.msra.mxu0 0.0
        %673 = vmatprep.subr.mxu0 0.0
        %674 = vmatpush1.msra.mxu0 0.0
        %675 = vmatprep.subr.mxu0 0.0
        %676 = vmatpush1.msra.mxu0 0.0
        %677 = vmatprep.subr.mxu0 0.0
        %678 = vmatpush1.msra.mxu0 0.0
        %679 = vmatprep.subr.mxu0 0.0
        %680 = vmatpush1.msra.mxu0 0.0
        %681 = vmatprep.subr.mxu0 0.0
        %682 = vmatpush1.msra.mxu0 0.0
        %683 = vmatprep.subr.mxu0 0.0
        %684 = vmatpush1.msra.mxu0 0.0
        %685 = vmatprep.subr.mxu0 0.0
        %686 = vmatpush1.msra.mxu0 0.0
        %687 = vmatprep.subr.mxu0 0.0
        %688 = vmatpush1.msra.mxu0 0.0
        %689 = vmatprep.subr.mxu0 0.0
        %690 = vmatpush1.msra.mxu0 0.0
        %691 = vmatprep.subr.mxu0 0.0
        %692 = vmatpush1.msra.mxu0 0.0
        %693 = vmatprep.subr.mxu0 0.0
        %694 = vmatpush1.msra.mxu0 0.0
        %695 = vmatprep.subr.mxu0 0.0
        %696 = vmatpush1.msra.mxu0 0.0
        %697 = vmatprep.subr.mxu0 0.0
        %698 = vmatpush1.msra.mxu0 0.0
        %699 = vmatprep.subr.mxu0 0.0
        %700 = vmatpush1.msra.mxu0 0.0
        %701 = vmatprep.subr.mxu0 0.0
        %702 = vmatpush1.msra.mxu0 0.0
        %703 = vmatprep.subr.mxu0 0.0
        %704 = vmatpush1.msra.mxu0 0.0
        %705 = vmatprep.subr.mxu0 0.0
        %706 = vmatpush1.msra.mxu0 0.0
        %707 = vmatprep.subr.mxu0 0.0
        %708 = vmatpush1.msra.mxu0 0.0
        %709 = vmatprep.subr.mxu0 0.0
        %710 = vmatpush1.msra.mxu0 0.0
        %711 = vmatprep.subr.mxu0 0.0
        %712 = vmatpush1.msra.mxu0 0.0
        %713 = vmatprep.subr.mxu0 0.0
        %714 = vmatpush1.msra.mxu0 0.0
        %715 = vmatprep.subr.mxu0 0.0
        %716 = vmatpush1.msra.mxu0 0.0
        %717 = vmatprep.subr.mxu0 0.0
        %718 = vmatpush1.msra.mxu0 0.0
        %719 = vmatprep.mubr.f32.mxu0 0.0
        %720 = vmatmul.mubr.f32.gmra.mrb[0].mxu0 %v653
        %v721 = vpop.f32.mrb[0].mxu0
        %v722 = vadd.f32 %v649, %v721
        %v723 = vpop.f32.mrb[0].mxu0
        %724 = vdwg.mxu0
        %v726 = vsel %vm578, %v577, 0
        %728 = vmatprep.subr.mxu0 0.0
        %729 = vmatpush1.msra.mxu0 %v574
        %730 = vmatprep.subr.mxu0 0.0
        %731 = vmatpush1.msra.mxu0 0.0
        %732 = vmatprep.subr.mxu0 0.0
        %733 = vmatpush1.msra.mxu0 0.0
        %734 = vmatprep.subr.mxu0 0.0
        %735 = vmatpush1.msra.mxu0 0.0
        %736 = vmatprep.subr.mxu0 0.0
        %737 = vmatpush1.msra.mxu0 0.0
        %738 = vmatprep.subr.mxu0 0.0
        %739 = vmatpush1.msra.mxu0 0.0
        %740 = vmatprep.subr.mxu0 0.0
        %741 = vmatpush1.msra.mxu0 0.0
        %742 = vmatprep.subr.mxu0 0.0
        %743 = vmatpush1.msra.mxu0 0.0
        %744 = vmatprep.subr.mxu0 0.0
        %745 = vmatpush1.msra.mxu0 0.0
        %746 = vmatprep.subr.mxu0 0.0
        %747 = vmatpush1.msra.mxu0 0.0
        %748 = vmatprep.subr.mxu0 0.0
        %749 = vmatpush1.msra.mxu0 0.0
        %750 = vmatprep.subr.mxu0 0.0
        %751 = vmatpush1.msra.mxu0 0.0
        %752 = vmatprep.subr.mxu0 0.0
        %753 = vmatpush1.msra.mxu0 0.0
        %754 = vmatprep.subr.mxu0 0.0
        %755 = vmatpush1.msra.mxu0 0.0
        %756 = vmatprep.subr.mxu0 0.0
        %757 = vmatpush1.msra.mxu0 0.0
        %758 = vmatprep.subr.mxu0 0.0
        %759 = vmatpush1.msra.mxu0 0.0
        %760 = vmatprep.subr.mxu0 0.0
        %761 = vmatpush1.msra.mxu0 0.0
        %762 = vmatprep.subr.mxu0 0.0
        %763 = vmatpush1.msra.mxu0 0.0
        %764 = vmatprep.subr.mxu0 0.0
        %765 = vmatpush1.msra.mxu0 0.0
        %766 = vmatprep.subr.mxu0 0.0
        %767 = vmatpush1.msra.mxu0 0.0
        %768 = vmatprep.subr.mxu0 0.0
        %769 = vmatpush1.msra.mxu0 0.0
        %770 = vmatprep.subr.mxu0 0.0
        %771 = vmatpush1.msra.mxu0 0.0
        %772 = vmatprep.subr.mxu0 0.0
        %773 = vmatpush1.msra.mxu0 0.0
        %774 = vmatprep.subr.mxu0 0.0
        %775 = vmatpush1.msra.mxu0 0.0
        %776 = vmatprep.subr.mxu0 0.0
        %777 = vmatpush1.msra.mxu0 0.0
        %778 = vmatprep.subr.mxu0 0.0
        %779 = vmatpush1.msra.mxu0 0.0
        %780 = vmatprep.subr.mxu0 0.0
        %781 = vmatpush1.msra.mxu0 0.0
        %782 = vmatprep.subr.mxu0 0.0
        %783 = vmatpush1.msra.mxu0 0.0
        %784 = vmatprep.subr.mxu0 0.0
        %785 = vmatpush1.msra.mxu0 0.0
        %786 = vmatprep.subr.mxu0 0.0
        %787 = vmatpush1.msra.mxu0 0.0
        %788 = vmatprep.subr.mxu0 0.0
        %789 = vmatpush1.msra.mxu0 0.0
        %790 = vmatprep.subr.mxu0 0.0
        %791 = vmatpush1.msra.mxu0 0.0
        %792 = vmatprep.mubr.f32.mxu0 0.0
        %793 = vmatmul.mubr.f32.gmra.mrb[0].mxu0 %v726
        %v794 = vpop.f32.mrb[0].mxu0
        %v795 = vadd.f32 0.0, %v794
        %v796 = vpop.f32.mrb[0].mxu0
        %797 = vdwg.mxu0
        %v798 = vadd.f32 %v722, %v795
        %v799 = vld [vmem:[%s5] sm:$0xff]
        %v800 = vld [vmem:[%s6] sm:$0xff]
        %801 = vadd.xlane.f32.xlu0 %v798
        %v802 = vpop.xlane.xlu0 %801
        %v803 = vrot.slane %v802, 4
        %v804 = vadd.f32 %v802, %v803
        %v805 = vrot.slane %v804, 2
        %v806 = vadd.f32 %v804, %v805
        %v807 = vrot.slane %v806, 1
        %v808 = vadd.f32 %v806, %v807
        %s809 = vtos %v808
        %v810 = vmul.f32 %v798, %v798
        %811 = vadd.xlane.f32.xlu0 %v810
        %v812 = vpop.xlane.xlu0 %811
        %v813 = vrot.slane %v812, 4
        %v814 = vadd.f32 %v812, %v813
        %v815 = vrot.slane %v814, 2
        %v816 = vadd.f32 %v814, %v815
        %v817 = vrot.slane %v816, 1
        %v818 = vadd.f32 %v816, %v817
        %s819 = vtos %v818
        %s820 = smul.f32 %s809, 0.0009765625
        %s821 = smul.f32 %s819, 0.0009765625
        %s822 = smul.f32 %s820, %s820
        %s823 = ssub.f32 %s821, %s822
        %s824 = sadd.f32 %s823, 1e-05
        %v825 = vstv %s824
        %v826 = vrsqrt.pop %v825
        %s827 = vtos %v826
        %v828 = vstv %s820
        %v829 = vsub.f32 %v798, %v828
        %v830 = vstv %s827
        %v831 = vmul.f32 %v829, %v830
        %833 = vset.pattern.permute.xlu0 0
        %834 = vperm.xlu0 %833, %v799
        %v835 = vpop.permute.xlu0 %834
        %v837 = vmul.f32 %v831, %v835
        %839 = vset.pattern.permute.xlu0 0
        %840 = vperm.xlu0 %839, %v800
        %v841 = vpop.permute.xlu0 %840
        %v843 = vadd.f32 %v837, %v841
        %844 = vst [vmem:[%s269] sm:$0xff] %v843
        %s845 = sand.u32 %s181, 1
        %s846 = scalar_lea.sflag [#allocation3], %s845
        %s847 = sand.u32 %s181, 1
        %s848 = smul.addr %s847, 8
        %s849 = scalar_lea.vmem [#allocation2], %s848
        // Predicated region
        $region49: #{tpu_custom_call.1} parent=47 // pred_check
          %p850 = pneg %p191
        $region50: #{tpu_custom_call.1} parent=47 // pred_check_branch
          %852 = sbr.rel (%p850) target = $region52
        $region51: #{tpu_custom_call.1} parent=47 // pred_region
          %s854 = ssub.s32 128, 128
          %855 = vsyncadd %s846, %s854
          %s856 = smul.addr %s21, 128
          %s857 = scalar_lea.hbm %s7, %s856
          %s859 = sshll.u32 %s849, 4
          %s860 = int_to_ptr.vmem [resolvable:$true] %s859
          %862 = dma.vmem_to_hbm [thread:$0]  %s860, 128, %s857, %s846
        $region52: #{tpu_custom_call.1} parent=47 // pred_fallthru
          _
      $region48: #{tpu_custom_call.1} parent=5 // pred_fallthru
        _
      %p863 = scmp.le.s32.totalorder 2, %s16
      // Predicated region
      $region53: #{tpu_custom_call.1} parent=5 // pred_check
        %p864 = pneg %p863
      $region54: #{tpu_custom_call.1} parent=5 // pred_check_branch
        %866 = sbr.rel (%p864) target = $region56
      $region55: #{tpu_custom_call.1} parent=5 // pred_region
        %s867 = ssub.s32 %s16, 2
        // Predicated region
        $region57: #{tpu_custom_call.1} parent=55 // pred_check
          %p868 = pneg %p197
        $region58: #{tpu_custom_call.1} parent=55 // pred_check_branch
          %870 = sbr.rel (%p868) target = $region60
        $region59: #{tpu_custom_call.1} parent=55 // pred_region
          %s871 = sand.u32 %s182, 1
          %s872 = scalar_lea.sflag [#allocation3], %s871
          %s873 = sand.u32 %s182, 1
          %s874 = smul.addr %s873, 8
          %s875 = scalar_lea.vmem [#allocation2], %s874
          %876 = dma.done %s872, 128
        $region60: #{tpu_custom_call.1} parent=55 // pred_fallthru
          _
      $region56: #{tpu_custom_call.1} parent=5 // pred_fallthru
        _
    $region6: #{tpu_custom_call.1} parent=1 // loop_footer
      %s20 = sadd.s32 1, %s16
    $region7: #{tpu_custom_call.1} parent=1 // loop_footer_branch
      %15 = sbr.rel target = $region3
    $region8: #{tpu_custom_call.1} parent=1 // loop_exit
      _
    %877 = vsyncpa [#allocation3], 1
    %s878 = scalar_lea.sflag [#allocation3], 1
    %879 = vsyncpa %s878, 1

</llo_original>
